<compile_context>
chip_gen: v7x
topology: tpu7x:2x2x1
jax: 0.10.0
libtpu: 0.0.40
codegen_flags: <defaults>
</compile_context>

<pallas_src>
import functools

import jax
import jax.numpy as jnp
from jax.experimental import pallas as pl
from jax.experimental.pallas import tpu as pltpu


def _round_up(x: int, m: int) -> int:
    return (x + m - 1) // m * m


def _ffn_kernel(x_ref, w1_ref, b1_ref, w2_ref, b2_ref, g_ref, beta_ref,
                o_ref, acc_ref, *, eps: float, d_in: int):
    """Grid = (token_tiles, hidden_tiles).  Hidden axis is a reduction."""
    k = pl.program_id(1)

    @pl.when(k == 0)
    def _():
        acc_ref[...] = jnp.zeros_like(acc_ref)

    # linear_1 (native-dtype operands, f32 accumulation) + bias + ReLU
    x = x_ref[...]                                   # (TM, d_in_pad)
    h = jnp.dot(x, w1_ref[...], preferred_element_type=jnp.float32)
    h = jnp.maximum(h + b1_ref[...].astype(jnp.float32), 0.0)

    # linear_2 partial product for this hidden tile, accumulate in f32 scratch
    h = h.astype(x.dtype)                            # back to MXU-native dtype
    acc_ref[...] += jnp.dot(h, w2_ref[...], preferred_element_type=jnp.float32)

    @pl.when(k == pl.num_programs(1) - 1)
    def _():
        # bias + dropout(identity) + residual.  Padded lanes of y are exactly 0
        # (zero-padded x / W2 columns / b2), so plain sums are exact.
        y = acc_ref[...] + b2_ref[...].astype(jnp.float32) \
            + x.astype(jnp.float32)

        d_pad = y.shape[-1]
        inv_d = 1.0 / d_in
        mean = jnp.sum(y, axis=-1, keepdims=True) * inv_d
        if d_pad == d_in:
            centered = y - mean
        else:
            lane = jax.lax.broadcasted_iota(jnp.int32, y.shape, dimension=1)
            centered = jnp.where(lane < d_in, y - mean, 0.0)
        var = jnp.sum(centered * centered, axis=-1, keepdims=True) * inv_d
        y_norm = centered * jax.lax.rsqrt(var + eps)

        out = y_norm * g_ref[...].astype(jnp.float32) \
            + beta_ref[...].astype(jnp.float32)
        o_ref[...] = out.astype(o_ref.dtype)


def position_wise_feed_forward(x, w1, b1, w2, b2, gamma, beta, *,
                               eps: float = 1e-6,
                               block_rows: int | None = None,
                               block_hidden: int | None = None,
                               vmem_limit_bytes: int | None = None,
                               compute_dtype=None):
    """x: (B, S, d_in). Returns (B, S, d_in)."""
    B, S, d_in = x.shape
    d_hid = w1.shape[1]
    N = B * S

    out_dtype = x.dtype
    op_dtype = jnp.dtype(compute_dtype) if compute_dtype is not None else jnp.dtype(x.dtype)
    itemsize = op_dtype.itemsize

    # ---- generation-aware defaults (v7x: 64 MiB VMEM/TC, v5e/v6e: 128 MiB)
    try:
        vmem_cap = int(pltpu.get_tpu_info().vmem_capacity_bytes)
    except Exception:
        vmem_cap = 64 * 1024 * 1024
    small_vmem = vmem_cap < 100 * 1024 * 1024
    if vmem_limit_bytes is None:
        if small_vmem:
            vmem_limit_bytes = min(int(0.75 * vmem_cap), 48 * 1024 * 1024)
        else:
            vmem_limit_bytes = min(int(0.80 * vmem_cap), 100 * 1024 * 1024)
    if block_rows is None:
        block_rows = 512 if small_vmem else 1024
    if block_hidden is None:
        block_hidden = 512 if small_vmem else 1024

    # ---- lane-dense model dim: pad d_in to a multiple of 128
    d_in_pad = _round_up(d_in, 128)

    # ---- token (M) tiling
    n_rounded = _round_up(N, 8)
    TM = min(block_rows, n_rounded)
    # keep at least 2 token tiles for megacore when there is enough work
    if TM >= n_rounded and n_rounded >= 512:
        TM = _round_up((n_rounded + 1) // 2, 8)

    # ---- hidden (K) tiling: prefer a single VMEM-resident weight tile
    d_hid_128 = _round_up(d_hid, 128)
    full_weight_bytes = 2 * d_in_pad * d_hid_128 * itemsize
    resident_cap = (8 if small_vmem else 16) * 1024 * 1024
    if d_hid <= block_hidden or full_weight_bytes <= resident_cap:
        TK = d_hid_128                      # single tile: weights DMA'd once
        d_hid_pad = d_hid_128
    else:
        TK = block_hidden                   # multiple of 128
        d_hid_pad = _round_up(d_hid, TK)

    # ---- VMEM budget: shrink TK first (doesn't add weight traffic), then TM
    def _vmem_estimate(tm, tk):
        return (2 * tm * d_in_pad * itemsize            # x tile (double buffered)
                + 2 * tm * d_in_pad * itemsize          # out tile
                + 2 * d_in_pad * tk * itemsize          # W1 tile
                + 2 * tk * d_in_pad * itemsize          # W2 tile
                + 2 * (tk + 3 * d_in_pad) * itemsize    # b1, b2, gamma, beta
                + tm * d_in_pad * 4                     # f32 accumulator scratch
                + tm * tk * (4 + itemsize))             # f32 h slab + native copy

    budget = int(0.9 * vmem_limit_bytes)
    while _vmem_estimate(TM, TK) > budget:
        if TK >= 512 and (TK // 2) % 128 == 0 and d_hid_pad % (TK // 2) == 0:
            TK //= 2
        elif TM > 256:
            TM = max(256, _round_up(TM // 2, 8))
        else:
            break
    N_pad = _round_up(N, TM)

    # ---- pad operands (zero padding is mathematically inert everywhere)
    x2d = x.reshape(N, d_in).astype(op_dtype)
    if (N_pad != N) or (d_in_pad != d_in):
        x2d = jnp.pad(x2d, ((0, N_pad - N), (0, d_in_pad - d_in)))

    w1_p = jnp.pad(w1.astype(op_dtype),
                   ((0, d_in_pad - d_in), (0, d_hid_pad - d_hid)))
    b1_p = jnp.pad(b1, ((0, d_hid_pad - d_hid),))
    w2_p = jnp.pad(w2.astype(op_dtype),
                   ((0, d_hid_pad - d_hid), (0, d_in_pad - d_in)))
    b2_p = jnp.pad(b2, ((0, d_in_pad - d_in),))
    g_p = jnp.pad(gamma, ((0, d_in_pad - d_in),))
    beta_p = jnp.pad(beta, ((0, d_in_pad - d_in),))

    b1_2d = b1_p.reshape(1, d_hid_pad)
    b2_2d = b2_p.reshape(1, d_in_pad)
    g_2d = g_p.reshape(1, d_in_pad)
    beta_2d = beta_p.reshape(1, d_in_pad)

    grid = (N_pad // TM, d_hid_pad // TK)
    n_token_tiles = grid[0]
    weight_bytes_total = 2 * d_in_pad * d_hid_pad * itemsize
    # weights are re-streamed once per token tile only when there are multiple
    # hidden tiles (block index changes); with a single hidden tile they are
    # fetched exactly once.
    weight_streams = n_token_tiles if grid[1] > 1 else 1

    cost = pl.CostEstimate(
        flops=int(4 * N_pad * d_in_pad * d_hid_pad),        # two matmuls
        transcendentals=int(N_pad),                         # one rsqrt per token
        bytes_accessed=int(N_pad * d_in_pad * itemsize            # x read
                           + N_pad * d_in_pad * out_dtype.itemsize if False else
                           N_pad * d_in_pad * itemsize            # x read
                           + N_pad * d_in_pad * jnp.dtype(out_dtype).itemsize  # out write
                           + weight_streams * weight_bytes_total),
    )

    out2d = pl.pallas_call(
        functools.partial(_ffn_kernel, eps=eps, d_in=d_in),
        out_shape=jax.ShapeDtypeStruct((N_pad, d_in_pad), out_dtype),
        grid_spec=pltpu.PrefetchScalarGridSpec(
            num_scalar_prefetch=0,
            grid=grid,
            in_specs=[
                pl.BlockSpec((TM, d_in_pad), lambda i, k: (i, 0)),     # x tile
                pl.BlockSpec((d_in_pad, TK), lambda i, k: (0, k)),     # W1 tile
                pl.BlockSpec((1, TK), lambda i, k: (0, k)),            # b1 tile
                pl.BlockSpec((TK, d_in_pad), lambda i, k: (k, 0)),     # W2 tile
                pl.BlockSpec((1, d_in_pad), lambda i, k: (0, 0)),      # b2
                pl.BlockSpec((1, d_in_pad), lambda i, k: (0, 0)),      # gamma
                pl.BlockSpec((1, d_in_pad), lambda i, k: (0, 0)),      # beta
            ],
            out_specs=pl.BlockSpec((TM, d_in_pad), lambda i, k: (i, 0)),
            scratch_shapes=[pltpu.VMEM((TM, d_in_pad), jnp.float32)],  # f32 acc
        ),
        compiler_params=pltpu.CompilerParams(
            dimension_semantics=("parallel", "arbitrary"),
            vmem_limit_bytes=vmem_limit_bytes),
        cost_estimate=cost,
    )(x2d, w1_p, b1_2d, w2_p, b2_2d, g_2d, beta_2d)

    out2d = out2d[:N, :d_in]
    return out2d.reshape(B, S, d_in)


def _reference(x, w1, b1, w2, b2, gamma, beta, eps=1e-6):
    h = jax.nn.relu(x @ w1 + b1)
    y = h @ w2 + b2
    y = y + x
    mean = jnp.mean(y, axis=-1, keepdims=True)
    var = jnp.mean((y - mean) ** 2, axis=-1, keepdims=True)
    return (y - mean) / jnp.sqrt(var + eps) * gamma + beta


if __name__ == "__main__":
    # Small shapes consistent with a Transformer FFN: (batch, seq, d_in)
    B, S, d_in, d_hid = 2, 8, 32, 64

    key = jax.random.PRNGKey(0)
    kx, kw1, kb1, kw2, kb2 = jax.random.split(key, 5)

    x = jax.random.normal(kx, (B, S, d_in), dtype=jnp.float32)

    # Deterministic parameter init (mimics nn.Linear uniform fan-in scaling)
    lim1 = 1.0 / (d_in ** 0.5)
    lim2 = 1.0 / (d_hid ** 0.5)
    w1 = jax.random.uniform(kw1, (d_in, d_hid), minval=-lim1, maxval=lim1, dtype=jnp.float32)
    b1 = jax.random.uniform(kb1, (d_hid,), minval=-lim1, maxval=lim1, dtype=jnp.float32)
    w2 = jax.random.uniform(kw2, (d_hid, d_in), minval=-lim2, maxval=lim2, dtype=jnp.float32)
    b2 = jax.random.uniform(kb2, (d_in,), minval=-lim2, maxval=lim2, dtype=jnp.float32)
    gamma = jnp.ones((d_in,), dtype=jnp.float32)   # nn.LayerNorm default weight
    beta = jnp.zeros((d_in,), dtype=jnp.float32)   # nn.LayerNorm default bias

    out = position_wise_feed_forward(x, w1, b1, w2, b2, gamma, beta)
    out = jax.block_until_ready(out)

    ref = _reference(x, w1, b1, w2, b2, gamma, beta)
    assert out.shape == (B, S, d_in)
    assert jnp.allclose(out, ref, atol=1e-4, rtol=1e-4), "mismatch vs reference"

    print("KERNEL_OK")
</pallas_src>

<mosaic_0001>
module attributes {stable_mosaic.version = 11 : i64} {
  func.func @_ffn_kernel(%arg0: i32, %arg1: i32, %arg2: memref<16x128xf32, #tpu.memory_space<vmem>>, %arg3: memref<128x128xf32, #tpu.memory_space<vmem>>, %arg4: memref<1x128xf32, #tpu.memory_space<vmem>>, %arg5: memref<128x128xf32, #tpu.memory_space<vmem>>, %arg6: memref<1x128xf32, #tpu.memory_space<vmem>>, %arg7: memref<1x128xf32, #tpu.memory_space<vmem>>, %arg8: memref<1x128xf32, #tpu.memory_space<vmem>>, %arg9: memref<16x128xf32, #tpu.memory_space<vmem>>, %arg10: memref<16x128xf32, #tpu.memory_space<vmem>>) attributes {dimension_semantics = [#tpu.dimension_semantics<parallel>, #tpu.dimension_semantics<arbitrary>], iteration_bounds = array<i64: 1, 1>, scalar_prefetch = 0 : i64, scratch_operands = 1 : i64, tpu.core_type = #tpu.core_type<tc>, window_params = [{transform_indices = @transform_0, window_bounds = array<i64: 16, 128>}, {transform_indices = @transform_1, window_bounds = array<i64: 128, 128>}, {transform_indices = @transform_2, window_bounds = array<i64: 1, 128>}, {transform_indices = @transform_3, window_bounds = array<i64: 128, 128>}, {pipeline_mode = #tpu.pipeline_mode<synchronous>, transform_indices = @transform_4, window_bounds = array<i64: 1, 128>}, {pipeline_mode = #tpu.pipeline_mode<synchronous>, transform_indices = @transform_5, window_bounds = array<i64: 1, 128>}, {pipeline_mode = #tpu.pipeline_mode<synchronous>, transform_indices = @transform_6, window_bounds = array<i64: 1, 128>}, {transform_indices = @transform_7, window_bounds = array<i64: 16, 128>}]} {
    %c0_i32 = arith.constant 0 : i32
    %0 = arith.cmpi eq, %arg1, %c0_i32 : i32
    %1 = arith.extui %0 : i1 to i32
    %c0_i32_0 = arith.constant 0 : i32
    %2 = arith.cmpi ne, %1, %c0_i32_0 : i32
    scf.if %2 {
      %cst_16 = arith.constant 0.000000e+00 : f32
      %19 = vector.broadcast %cst_16 : f32 to vector<16x128xf32>
      %c0_17 = arith.constant 0 : index
      %c0_18 = arith.constant 0 : index
      %20 = vector.load %arg10[%c0_17, %c0_18] : memref<16x128xf32, #tpu.memory_space<vmem>>, vector<16x128xf32>
      tpu.vector_store %arg10[%c0_17, %c0_18], %19 {strides = array<i32>} : memref<16x128xf32, #tpu.memory_space<vmem>>, vector<16x128xf32>,
    } else {
    }
    %c0 = arith.constant 0 : index
    %c0_1 = arith.constant 0 : index
    %3 = vector.load %arg2[%c0, %c0_1] : memref<16x128xf32, #tpu.memory_space<vmem>>, vector<16x128xf32>
    %c0_2 = arith.constant 0 : index
    %c0_3 = arith.constant 0 : index
    %4 = vector.load %arg3[%c0_2, %c0_3] : memref<128x128xf32, #tpu.memory_space<vmem>>, vector<128x128xf32>
    %cst = arith.constant dense<0.000000e+00> : vector<16x128xf32>
    %5 = tpu.matmul %3, %4, %cst {dimension_numbers = #tpu.dot_dimension_numbers<[1], [0], [0], [1], [0, 0, 1, 1], [], []>} : vector<16x128xf32>, vector<128x128xf32>, vector<16x128xf32> -> vector<16x128xf32>
    %c0_4 = arith.constant 0 : index
    %c0_5 = arith.constant 0 : index
    %6 = vector.load %arg4[%c0_4, %c0_5] : memref<1x128xf32, #tpu.memory_space<vmem>>, vector<1x128xf32>
    %7 = vector.broadcast %6 : vector<1x128xf32> to vector<16x128xf32>
    %8 = arith.addf %5, %7 : vector<16x128xf32>
    %cst_6 = arith.constant 0.000000e+00 : f32
    %9 = vector.broadcast %cst_6 : f32 to vector<16x128xf32>
    %10 = arith.maximumf %8, %9 : vector<16x128xf32>
    %c0_7 = arith.constant 0 : index
    %c0_8 = arith.constant 0 : index
    %11 = vector.load %arg10[%c0_7, %c0_8] : memref<16x128xf32, #tpu.memory_space<vmem>>, vector<16x128xf32>
    %c0_9 = arith.constant 0 : index
    %c0_10 = arith.constant 0 : index
    %12 = vector.load %arg5[%c0_9, %c0_10] : memref<128x128xf32, #tpu.memory_space<vmem>>, vector<128x128xf32>
    %cst_11 = arith.constant dense<0.000000e+00> : vector<16x128xf32>
    %13 = tpu.matmul %10, %12, %cst_11 {dimension_numbers = #tpu.dot_dimension_numbers<[1], [0], [0], [1], [0, 0, 1, 1], [], []>} : vector<16x128xf32>, vector<128x128xf32>, vector<16x128xf32> -> vector<16x128xf32>
    %14 = arith.addf %11, %13 : vector<16x128xf32>
    %c0_12 = arith.constant 0 : index
    %c0_13 = arith.constant 0 : index
    %15 = vector.load %arg10[%c0_12, %c0_13] : memref<16x128xf32, #tpu.memory_space<vmem>>, vector<16x128xf32>
    tpu.vector_store %arg10[%c0_12, %c0_13], %14 {strides = array<i32>} : memref<16x128xf32, #tpu.memory_space<vmem>>, vector<16x128xf32>,
    %c0_i32_14 = arith.constant 0 : i32
    %16 = arith.cmpi eq, %arg1, %c0_i32_14 : i32
    %17 = arith.extui %16 : i1 to i32
    %c0_i32_15 = arith.constant 0 : i32
    %18 = arith.cmpi ne, %17, %c0_i32_15 : i32
    scf.if %18 {
      %c0_16 = arith.constant 0 : index
      %c0_17 = arith.constant 0 : index
      %19 = vector.load %arg10[%c0_16, %c0_17] : memref<16x128xf32, #tpu.memory_space<vmem>>, vector<16x128xf32>
      %c0_18 = arith.constant 0 : index
      %c0_19 = arith.constant 0 : index
      %20 = vector.load %arg6[%c0_18, %c0_19] : memref<1x128xf32, #tpu.memory_space<vmem>>, vector<1x128xf32>
      %21 = vector.broadcast %20 : vector<1x128xf32> to vector<16x128xf32>
      %22 = arith.addf %19, %21 : vector<16x128xf32>
      %23 = arith.addf %22, %3 : vector<16x128xf32>
      %cst_20 = arith.constant dense<0.000000e+00> : vector<16xf32>
      %24 = vector.multi_reduction <add>, %23, %cst_20 [1] : vector<16x128xf32> to vector<16xf32>
      %25 = vector.shape_cast %24 : vector<16xf32> to vector<16x1xf32>
      %cst_21 = arith.constant 3.125000e-02 : f32
      %26 = vector.broadcast %cst_21 : f32 to vector<16x1xf32>
      %27 = arith.mulf %25, %26 : vector<16x1xf32>
      %28 = tpu.iota {dimensions = array<i32: 1>} : vector<16x128xi32>
      %c32_i32 = arith.constant 32 : i32
      %29 = vector.broadcast %c32_i32 : i32 to vector<16x128xi32>
      %30 = arith.cmpi slt, %28, %29 : vector<16x128xi32>
      %31 = vector.broadcast %27 : vector<16x1xf32> to vector<16x128xf32>
      %32 = arith.subf %23, %31 : vector<16x128xf32>
      %cst_22 = arith.constant 0.000000e+00 : f32
      %33 = vector.broadcast %cst_22 : f32 to vector<16x128xf32>
      %34 = arith.select %30, %32, %33 : vector<16x128xi1>, vector<16x128xf32>
      %35 = arith.mulf %34, %34 : vector<16x128xf32>
      %cst_23 = arith.constant dense<0.000000e+00> : vector<16xf32>
      %36 = vector.multi_reduction <add>, %35, %cst_23 [1] : vector<16x128xf32> to vector<16xf32>
      %37 = vector.shape_cast %36 : vector<16xf32> to vector<16x1xf32>
      %cst_24 = arith.constant 3.125000e-02 : f32
      %38 = vector.broadcast %cst_24 : f32 to vector<16x1xf32>
      %39 = arith.mulf %37, %38 : vector<16x1xf32>
      %cst_25 = arith.constant 9.99999997E-7 : f32
      %40 = vector.broadcast %cst_25 : f32 to vector<16x1xf32>
      %41 = arith.addf %39, %40 : vector<16x1xf32>
      %42 = math.rsqrt %41 : vector<16x1xf32>
      %43 = vector.broadcast %42 : vector<16x1xf32> to vector<16x128xf32>
      %44 = arith.mulf %34, %43 : vector<16x128xf32>
      %c0_26 = arith.constant 0 : index
      %c0_27 = arith.constant 0 : index
      %45 = vector.load %arg7[%c0_26, %c0_27] : memref<1x128xf32, #tpu.memory_space<vmem>>, vector<1x128xf32>
      %46 = vector.broadcast %45 : vector<1x128xf32> to vector<16x128xf32>
      %47 = arith.mulf %44, %46 : vector<16x128xf32>
      %c0_28 = arith.constant 0 : index
      %c0_29 = arith.constant 0 : index
      %48 = vector.load %arg8[%c0_28, %c0_29] : memref<1x128xf32, #tpu.memory_space<vmem>>, vector<1x128xf32>
      %49 = vector.broadcast %48 : vector<1x128xf32> to vector<16x128xf32>
      %50 = arith.addf %47, %49 : vector<16x128xf32>
      %c0_30 = arith.constant 0 : index
      %c0_31 = arith.constant 0 : index
      %51 = vector.load %arg9[%c0_30, %c0_31] : memref<16x128xf32, #tpu.memory_space<vmem>>, vector<16x128xf32>
      tpu.vector_store %arg9[%c0_30, %c0_31], %50 {strides = array<i32>} : memref<16x128xf32, #tpu.memory_space<vmem>>, vector<16x128xf32>,
    } else {
    }
    return
  }
  func.func @transform_0(%arg0: i32, %arg1: i32) -> (i32, i32) {
    %c0_i32 = arith.constant 0 : i32
    %c0_i32_0 = arith.constant 0 : i32
    return %arg0, %c0_i32 : i32, i32
  }
  func.func @transform_1(%arg0: i32, %arg1: i32) -> (i32, i32) {
    %c0_i32 = arith.constant 0 : i32
    %c0_i32_0 = arith.constant 0 : i32
    return %c0_i32, %arg1 : i32, i32
  }
  func.func @transform_2(%arg0: i32, %arg1: i32) -> (i32, i32) {
    %c0_i32 = arith.constant 0 : i32
    %c0_i32_0 = arith.constant 0 : i32
    return %c0_i32, %arg1 : i32, i32
  }
  func.func @transform_3(%arg0: i32, %arg1: i32) -> (i32, i32) {
    %c0_i32 = arith.constant 0 : i32
    %c0_i32_0 = arith.constant 0 : i32
    return %arg1, %c0_i32 : i32, i32
  }
  func.func @transform_4(%arg0: i32, %arg1: i32) -> (i32, i32) {
    %c0_i32 = arith.constant 0 : i32
    %c0_i32_0 = arith.constant 0 : i32
    %c0_i32_1 = arith.constant 0 : i32
    return %c0_i32, %c0_i32_0 : i32, i32
  }
  func.func @transform_5(%arg0: i32, %arg1: i32) -> (i32, i32) {
    %c0_i32 = arith.constant 0 : i32
    %c0_i32_0 = arith.constant 0 : i32
    %c0_i32_1 = arith.constant 0 : i32
    return %c0_i32, %c0_i32_0 : i32, i32
  }
  func.func @transform_6(%arg0: i32, %arg1: i32) -> (i32, i32) {
    %c0_i32 = arith.constant 0 : i32
    %c0_i32_0 = arith.constant 0 : i32
    %c0_i32_1 = arith.constant 0 : i32
    return %c0_i32, %c0_i32_0 : i32, i32
  }
  func.func @transform_7(%arg0: i32, %arg1: i32) -> (i32, i32) {
    %c0_i32 = arith.constant 0 : i32
    %c0_i32_0 = arith.constant 0 : i32
    return %arg0, %c0_i32 : i32, i32
  }
}

</mosaic_0001>

<llo_original>
// kernel: tpu_custom_call.1
$region0: #{tpu_custom_call.1}
  #allocation0 [shape = 'u32[]', space=smem, size = 0x4, offset = 0x4, fixed_abs, tag = 'smem constant byte address 0x4 - core index']
  #allocation1 [shape = 'u32[144,128]{1,0:T(1,128)}', space=vmem, size = 0x12000, scoped, tag = 'internal scratch']
  #allocation2 [shape = 'f32[16,128]{1,0:T(8,128)}', space=vmem, size = 0x2000, scoped, tag = 'scratch operand']
  %s0 = inlined_call_operand.hbm [shape: f32[16,128], index: 0, kind: input, shape index: {}]
  %s1 = inlined_call_operand.hbm [shape: f32[128,128], index: 1, kind: input, shape index: {}]
  %s2 = inlined_call_operand.vmem [shape: f32[1,128], index: 2, kind: input, shape index: {}]
  %s3 = inlined_call_operand.hbm [shape: f32[128,128], index: 3, kind: input, shape index: {}]
  %s4 = inlined_call_operand.vmem [shape: f32[1,128], index: 4, kind: input, shape index: {}]
  %s5 = inlined_call_operand.vmem [shape: f32[1,128], index: 5, kind: input, shape index: {}]
  %s6 = inlined_call_operand.vmem [shape: f32[1,128], index: 6, kind: input, shape index: {}]
  %s7 = inlined_call_operand.hbm [shape: f32[16,128], index: 7, kind: output, shape index: {}]
  %s8 = sld [smem:[#allocation0]]
  $region58: #{tpu_custom_call.1} parent=0
    _
  %s10 = ssub.s32 1, %s8
  %s11 = scalar_select 0, %s10, %s8
  $region1: #{tpu_custom_call.1} parent=0
    #allocation3 [shape = 'u8[8192]{0}', space=vmem, size = 0x2000, scoped, tag = 'input window, operand 0, single buffered']
    #allocation4 [shape = 's32[1]{0}', space=sflag, size = 0x4, scoped, tag = 'scoped memory for tpu_custom_call.1']
    #allocation5 [shape = 's32[1]{0}', space=sflag, size = 0x4, scoped, tag = 'scoped memory for tpu_custom_call.1']
    #allocation6 [shape = 'u8[65536]{0}', space=vmem, size = 0x10000, scoped, tag = 'input window, operand 1, single buffered']
    #allocation7 [shape = 's32[1]{0}', space=sflag, size = 0x4, scoped, tag = 'scoped memory for tpu_custom_call.1']
    #allocation8 [shape = 'u8[65536]{0}', space=vmem, size = 0x10000, scoped, tag = 'input window, operand 3, single buffered']
    #allocation9 [shape = 'u8[8192]{0}', space=vmem, size = 0x2000, scoped, tag = 'output window, operand 0, single buffered']
    %12 = vsyncpa [#allocation4], 0
    %13 = vsyncpa [#allocation7], 0
    %14 = vsyncpa [#allocation5], 0
    // Predicated region
    $region2: #{tpu_custom_call.1} parent=1 // pred_check
      _
    $region3: #{tpu_custom_call.1} parent=1 // pred_check_branch
      %16 = sbr.rel (0) target = $region5
    $region4: #{tpu_custom_call.1} parent=1 // pred_region
      %s18 = ssub.s32 256, 256
      %19 = vsyncadd [#allocation4], %s18
      %s20 = sshll.u32 [#allocation3], 4
      %s21 = int_to_ptr.vmem [resolvable:$true] %s20
      %26 = dma.hbm_to_vmem [thread:$0]  %s0, 256, %s21, [#allocation4], 128, 128, 8
    $region5: #{tpu_custom_call.1} parent=1 // pred_fallthru
      _
    // Predicated region
    $region6: #{tpu_custom_call.1} parent=1 // pred_check
      _
    $region7: #{tpu_custom_call.1} parent=1 // pred_check_branch
      %28 = sbr.rel (0) target = $region9
    $region8: #{tpu_custom_call.1} parent=1 // pred_region
      %s30 = ssub.s32 2048, 2048
      %31 = vsyncadd [#allocation7], %s30
      %s32 = sshll.u32 [#allocation6], 4
      %s33 = int_to_ptr.vmem [resolvable:$true] %s32
      %38 = dma.hbm_to_vmem [thread:$0]  %s1, 2048, %s33, [#allocation7], 128, 128, 8
    $region9: #{tpu_custom_call.1} parent=1 // pred_fallthru
      _
    // Predicated region
    $region10: #{tpu_custom_call.1} parent=1 // pred_check
      _
    $region11: #{tpu_custom_call.1} parent=1 // pred_check_branch
      %40 = sbr.rel (0) target = $region13
    $region12: #{tpu_custom_call.1} parent=1 // pred_region
      _
    $region13: #{tpu_custom_call.1} parent=1 // pred_fallthru
      _
    // Predicated region
    $region14: #{tpu_custom_call.1} parent=1 // pred_check
      _
    $region15: #{tpu_custom_call.1} parent=1 // pred_check_branch
      %42 = sbr.rel (0) target = $region17
    $region16: #{tpu_custom_call.1} parent=1 // pred_region
      %s44 = ssub.s32 2048, 2048
      %45 = vsyncadd [#allocation7], %s44
      %s46 = sshll.u32 [#allocation8], 4
      %s47 = int_to_ptr.vmem [resolvable:$true] %s46
      %52 = dma.hbm_to_vmem [thread:$0]  %s3, 2048, %s47, [#allocation7], 128, 128, 8
    $region17: #{tpu_custom_call.1} parent=1 // pred_fallthru
      _
    // Predicated region
    $region18: #{tpu_custom_call.1} parent=1 // pred_check
      _
    $region19: #{tpu_custom_call.1} parent=1 // pred_check_branch
      %54 = sbr.rel (0) target = $region21
    $region20: #{tpu_custom_call.1} parent=1 // pred_region
      _
    $region21: #{tpu_custom_call.1} parent=1 // pred_fallthru
      _
    // Predicated region
    $region22: #{tpu_custom_call.1} parent=1 // pred_check
      _
    $region23: #{tpu_custom_call.1} parent=1 // pred_check_branch
      %56 = sbr.rel (0) target = $region25
    $region24: #{tpu_custom_call.1} parent=1 // pred_region
      _
    $region25: #{tpu_custom_call.1} parent=1 // pred_fallthru
      _
    // Predicated region
    $region26: #{tpu_custom_call.1} parent=1 // pred_check
      _
    $region27: #{tpu_custom_call.1} parent=1 // pred_check_branch
      %58 = sbr.rel (0) target = $region29
    $region28: #{tpu_custom_call.1} parent=1 // pred_region
      _
    $region29: #{tpu_custom_call.1} parent=1 // pred_fallthru
      _
    // Predicated region
    $region30: #{tpu_custom_call.1} parent=1 // pred_check
      _
    $region31: #{tpu_custom_call.1} parent=1 // pred_check_branch
      %60 = sbr.rel (0) target = $region33
    $region32: #{tpu_custom_call.1} parent=1 // pred_region
      %61 = dma.done [#allocation4], 256
    $region33: #{tpu_custom_call.1} parent=1 // pred_fallthru
      _
    // Predicated region
    $region34: #{tpu_custom_call.1} parent=1 // pred_check
      _
    $region35: #{tpu_custom_call.1} parent=1 // pred_check_branch
      %63 = sbr.rel (0) target = $region37
    $region36: #{tpu_custom_call.1} parent=1 // pred_region
      %64 = dma.done [#allocation7], 2048
    $region37: #{tpu_custom_call.1} parent=1 // pred_fallthru
      _
    // Predicated region
    $region38: #{tpu_custom_call.1} parent=1 // pred_check
      _
    $region39: #{tpu_custom_call.1} parent=1 // pred_check_branch
      %66 = sbr.rel (0) target = $region41
    $region40: #{tpu_custom_call.1} parent=1 // pred_region
      %67 = dma.done [#allocation7], 2048
    $region41: #{tpu_custom_call.1} parent=1 // pred_fallthru
      _
    %p68 = scmp.eq.s32.totalorder 0, 0
    // Predicated region
    $region42: #{tpu_custom_call.1} parent=1 // pred_check
      %p69 = pneg %p68
    $region43: #{tpu_custom_call.1} parent=1 // pred_check_branch
      %71 = sbr.rel (%p69) target = $region45
    $region44: #{tpu_custom_call.1} parent=1 // pred_region
      %72 = vst [vmem:[#allocation2] sm:$0xff] 0.0
      %73 = vst [vmem:[#allocation2 + $0x8] sm:$0xff] 0.0
    $region45: #{tpu_custom_call.1} parent=1 // pred_fallthru
      _
    %v74 = vld [vmem:[#allocation3] sm:$0xff]
    %v75 = vld [vmem:[#allocation3 + $0x8] sm:$0xff]
    %v76 = vld [vmem:[#allocation6] sm:$0xff]
    %v77 = vld [vmem:[#allocation6 + $0x8] sm:$0xff]
    %v78 = vld [vmem:[#allocation6 + $0x10] sm:$0xff]
    %v79 = vld [vmem:[#allocation6 + $0x18] sm:$0xff]
    %v80 = vld [vmem:[#allocation6 + $0x20] sm:$0xff]
    %v81 = vld [vmem:[#allocation6 + $0x28] sm:$0xff]
    %v82 = vld [vmem:[#allocation6 + $0x30] sm:$0xff]
    %v83 = vld [vmem:[#allocation6 + $0x38] sm:$0xff]
    %v84 = vld [vmem:[#allocation6 + $0x40] sm:$0xff]
    %v85 = vld [vmem:[#allocation6 + $0x48] sm:$0xff]
    %v86 = vld [vmem:[#allocation6 + $0x50] sm:$0xff]
    %v87 = vld [vmem:[#allocation6 + $0x58] sm:$0xff]
    %v88 = vld [vmem:[#allocation6 + $0x60] sm:$0xff]
    %v89 = vld [vmem:[#allocation6 + $0x68] sm:$0xff]
    %v90 = vld [vmem:[#allocation6 + $0x70] sm:$0xff]
    %v91 = vld [vmem:[#allocation6 + $0x78] sm:$0xff]
    %v92 = vld [vmem:[%s2] sm:$0x1]
    %v94 = vlaneseq
    %v95 = vshrl.u32 %v94, 7
    %v96 = vsub.s32 0, %v95
    %v97 = vrot.slane %v92, %v96
    %99 = vmatprep.subr.mxu0 0.0
    %100 = vmatpush1.msra.mxu0 %v76
    %101 = vmatprep.subr.mxu0 0.0
    %102 = vmatpush1.msra.mxu0 %v77
    %103 = vmatprep.subr.mxu0 0.0
    %104 = vmatpush1.msra.mxu0 %v78
    %105 = vmatprep.subr.mxu0 0.0
    %106 = vmatpush1.msra.mxu0 %v79
    %107 = vmatprep.subr.mxu0 0.0
    %108 = vmatpush1.msra.mxu0 %v80
    %109 = vmatprep.subr.mxu0 0.0
    %110 = vmatpush1.msra.mxu0 %v81
    %111 = vmatprep.subr.mxu0 0.0
    %112 = vmatpush1.msra.mxu0 %v82
    %113 = vmatprep.subr.mxu0 0.0
    %114 = vmatpush1.msra.mxu0 %v83
    %115 = vmatprep.subr.mxu0 0.0
    %116 = vmatpush1.msra.mxu0 %v84
    %117 = vmatprep.subr.mxu0 0.0
    %118 = vmatpush1.msra.mxu0 %v85
    %119 = vmatprep.subr.mxu0 0.0
    %120 = vmatpush1.msra.mxu0 %v86
    %121 = vmatprep.subr.mxu0 0.0
    %122 = vmatpush1.msra.mxu0 %v87
    %123 = vmatprep.subr.mxu0 0.0
    %124 = vmatpush1.msra.mxu0 %v88
    %125 = vmatprep.subr.mxu0 0.0
    %126 = vmatpush1.msra.mxu0 %v89
    %127 = vmatprep.subr.mxu0 0.0
    %128 = vmatpush1.msra.mxu0 %v90
    %129 = vmatprep.subr.mxu0 0.0
    %130 = vmatpush1.msra.mxu0 %v91
    %131 = vmatprep.subr.mxu0 0.0
    %132 = vmatpush1.msra.mxu0 0.0
    %133 = vmatprep.subr.mxu0 0.0
    %134 = vmatpush1.msra.mxu0 0.0
    %135 = vmatprep.subr.mxu0 0.0
    %136 = vmatpush1.msra.mxu0 0.0
    %137 = vmatprep.subr.mxu0 0.0
    %138 = vmatpush1.msra.mxu0 0.0
    %139 = vmatprep.subr.mxu0 0.0
    %140 = vmatpush1.msra.mxu0 0.0
    %141 = vmatprep.subr.mxu0 0.0
    %142 = vmatpush1.msra.mxu0 0.0
    %143 = vmatprep.subr.mxu0 0.0
    %144 = vmatpush1.msra.mxu0 0.0
    %145 = vmatprep.subr.mxu0 0.0
    %146 = vmatpush1.msra.mxu0 0.0
    %147 = vmatprep.subr.mxu0 0.0
    %148 = vmatpush1.msra.mxu0 0.0
    %149 = vmatprep.subr.mxu0 0.0
    %150 = vmatpush1.msra.mxu0 0.0
    %151 = vmatprep.subr.mxu0 0.0
    %152 = vmatpush1.msra.mxu0 0.0
    %153 = vmatprep.subr.mxu0 0.0
    %154 = vmatpush1.msra.mxu0 0.0
    %155 = vmatprep.subr.mxu0 0.0
    %156 = vmatpush1.msra.mxu0 0.0
    %157 = vmatprep.subr.mxu0 0.0
    %158 = vmatpush1.msra.mxu0 0.0
    %159 = vmatprep.subr.mxu0 0.0
    %160 = vmatpush1.msra.mxu0 0.0
    %161 = vmatprep.subr.mxu0 0.0
    %162 = vmatpush1.msra.mxu0 0.0
    %163 = vmatprep.mubr.f32.mxu0 0.0
    %164 = vmatmul.mubr.f32.gmra.mrb[0].mxu0 %v74
    %v165 = vpop.f32.mrb[0].mxu0
    %v166 = vadd.f32 %v97, %v165
    %v167 = vpop.f32.mrb[0].mxu0
    %168 = vmatprep.mubr.f32.mxu0 0.0
    %169 = vmatmul.mubr.f32.gmra.mrb[0].mxu0 %v75
    %v170 = vpop.f32.mrb[0].mxu0
    %v171 = vadd.f32 %v97, %v170
    %v172 = vpop.f32.mrb[0].mxu0
    %173 = vdwg.mxu0
    %v174 = vmax.f32 %v166, 0.0
    %v175 = vmax.f32 %v171, 0.0
    %v176 = vld [vmem:[#allocation2] sm:$0xff]
    %v177 = vld [vmem:[#allocation2 + $0x8] sm:$0xff]
    %v178 = vld [vmem:[#allocation8] sm:$0xff]
    %v179 = vld [vmem:[#allocation8 + $0x8] sm:$0xff]
    %v180 = vld [vmem:[#allocation8 + $0x10] sm:$0xff]
    %v181 = vld [vmem:[#allocation8 + $0x18] sm:$0xff]
    %v182 = vld [vmem:[#allocation8 + $0x20] sm:$0xff]
    %v183 = vld [vmem:[#allocation8 + $0x28] sm:$0xff]
    %v184 = vld [vmem:[#allocation8 + $0x30] sm:$0xff]
    %v185 = vld [vmem:[#allocation8 + $0x38] sm:$0xff]
    %v186 = vld [vmem:[#allocation8 + $0x40] sm:$0xff]
    %v187 = vld [vmem:[#allocation8 + $0x48] sm:$0xff]
    %v188 = vld [vmem:[#allocation8 + $0x50] sm:$0xff]
    %v189 = vld [vmem:[#allocation8 + $0x58] sm:$0xff]
    %v190 = vld [vmem:[#allocation8 + $0x60] sm:$0xff]
    %v191 = vld [vmem:[#allocation8 + $0x68] sm:$0xff]
    %v192 = vld [vmem:[#allocation8 + $0x70] sm:$0xff]
    %v193 = vld [vmem:[#allocation8 + $0x78] sm:$0xff]
    %194 = vmatprep.subr.mxu0 0.0
    %195 = vmatpush1.msra.mxu0 %v178
    %196 = vmatprep.subr.mxu0 0.0
    %197 = vmatpush1.msra.mxu0 %v179
    %198 = vmatprep.subr.mxu0 0.0
    %199 = vmatpush1.msra.mxu0 %v180
    %200 = vmatprep.subr.mxu0 0.0
    %201 = vmatpush1.msra.mxu0 %v181
    %202 = vmatprep.subr.mxu0 0.0
    %203 = vmatpush1.msra.mxu0 %v182
    %204 = vmatprep.subr.mxu0 0.0
    %205 = vmatpush1.msra.mxu0 %v183
    %206 = vmatprep.subr.mxu0 0.0
    %207 = vmatpush1.msra.mxu0 %v184
    %208 = vmatprep.subr.mxu0 0.0
    %209 = vmatpush1.msra.mxu0 %v185
    %210 = vmatprep.subr.mxu0 0.0
    %211 = vmatpush1.msra.mxu0 %v186
    %212 = vmatprep.subr.mxu0 0.0
    %213 = vmatpush1.msra.mxu0 %v187
    %214 = vmatprep.subr.mxu0 0.0
    %215 = vmatpush1.msra.mxu0 %v188
    %216 = vmatprep.subr.mxu0 0.0
    %217 = vmatpush1.msra.mxu0 %v189
    %218 = vmatprep.subr.mxu0 0.0
    %219 = vmatpush1.msra.mxu0 %v190
    %220 = vmatprep.subr.mxu0 0.0
    %221 = vmatpush1.msra.mxu0 %v191
    %222 = vmatprep.subr.mxu0 0.0
    %223 = vmatpush1.msra.mxu0 %v192
    %224 = vmatprep.subr.mxu0 0.0
    %225 = vmatpush1.msra.mxu0 %v193
    %226 = vmatprep.subr.mxu0 0.0
    %227 = vmatpush1.msra.mxu0 0.0
    %228 = vmatprep.subr.mxu0 0.0
    %229 = vmatpush1.msra.mxu0 0.0
    %230 = vmatprep.subr.mxu0 0.0
    %231 = vmatpush1.msra.mxu0 0.0
    %232 = vmatprep.subr.mxu0 0.0
    %233 = vmatpush1.msra.mxu0 0.0
    %234 = vmatprep.subr.mxu0 0.0
    %235 = vmatpush1.msra.mxu0 0.0
    %236 = vmatprep.subr.mxu0 0.0
    %237 = vmatpush1.msra.mxu0 0.0
    %238 = vmatprep.subr.mxu0 0.0
    %239 = vmatpush1.msra.mxu0 0.0
    %240 = vmatprep.subr.mxu0 0.0
    %241 = vmatpush1.msra.mxu0 0.0
    %242 = vmatprep.subr.mxu0 0.0
    %243 = vmatpush1.msra.mxu0 0.0
    %244 = vmatprep.subr.mxu0 0.0
    %245 = vmatpush1.msra.mxu0 0.0
    %246 = vmatprep.subr.mxu0 0.0
    %247 = vmatpush1.msra.mxu0 0.0
    %248 = vmatprep.subr.mxu0 0.0
    %249 = vmatpush1.msra.mxu0 0.0
    %250 = vmatprep.subr.mxu0 0.0
    %251 = vmatpush1.msra.mxu0 0.0
    %252 = vmatprep.subr.mxu0 0.0
    %253 = vmatpush1.msra.mxu0 0.0
    %254 = vmatprep.subr.mxu0 0.0
    %255 = vmatpush1.msra.mxu0 0.0
    %256 = vmatprep.subr.mxu0 0.0
    %257 = vmatpush1.msra.mxu0 0.0
    %258 = vmatprep.mubr.f32.mxu0 0.0
    %259 = vmatmul.mubr.f32.gmra.mrb[0].mxu0 %v174
    %v260 = vpop.f32.mrb[0].mxu0
    %v261 = vadd.f32 0.0, %v260
    %v262 = vpop.f32.mrb[0].mxu0
    %263 = vmatprep.mubr.f32.mxu0 0.0
    %264 = vmatmul.mubr.f32.gmra.mrb[0].mxu0 %v175
    %v265 = vpop.f32.mrb[0].mxu0
    %v266 = vadd.f32 0.0, %v265
    %v267 = vpop.f32.mrb[0].mxu0
    %268 = vdwg.mxu0
    %v269 = vadd.f32 %v176, %v261
    %v270 = vadd.f32 %v177, %v266
    %271 = vst [vmem:[#allocation2] sm:$0xff] %v269
    %272 = vst [vmem:[#allocation2 + $0x8] sm:$0xff] %v270
    // Predicated region
    $region46: #{tpu_custom_call.1} parent=1 // pred_check
      %p273 = pneg %p68
    $region47: #{tpu_custom_call.1} parent=1 // pred_check_branch
      %275 = sbr.rel (%p273) target = $region49
    $region48: #{tpu_custom_call.1} parent=1 // pred_region
      %v276 = vld [vmem:[#allocation2] sm:$0xff]
      %v277 = vld [vmem:[#allocation2 + $0x8] sm:$0xff]
      %v278 = vld [vmem:[%s4] sm:$0x1]
      %v280 = vlaneseq
      %v281 = vshrl.u32 %v280, 7
      %v282 = vsub.s32 0, %v281
      %v283 = vrot.slane %v278, %v282
      %v285 = vadd.f32 %v276, %v283
      %v286 = vadd.f32 %v277, %v283
      %v287 = vadd.f32 %v285, %v74
      %v288 = vadd.f32 %v286, %v75
      %289 = vadd.xlane.f32.xlu0 %v287
      %v290 = vpop.xlane.xlu0 %289
      %291 = vadd.xlane.f32.xlu0 %v288
      %v292 = vpop.xlane.xlu0 %291
      %v293 = vmul.f32 %v290, 0.03125
      %v294 = vmul.f32 %v292, 0.03125
      %v295 = vlaneseq
      %v296 = vand.u32 %v295, 127
      %vm297 = vcmp.lt.s32.totalorder %v296, 32
      %v298 = vsub.f32 %v287, %v293
      %v299 = vsub.f32 %v288, %v294
      %v300 = vsel %vm297, %v298, 0.0
      %v301 = vsel %vm297, %v299, 0.0
      %v302 = vmul.f32 %v300, %v300
      %v303 = vmul.f32 %v301, %v301
      %304 = vadd.xlane.f32.xlu0 %v302
      %v305 = vpop.xlane.xlu0 %304
      %306 = vadd.xlane.f32.xlu0 %v303
      %v307 = vpop.xlane.xlu0 %306
      %v308 = vmul.f32 %v305, 0.03125
      %v309 = vmul.f32 %v307, 0.03125
      %v310 = vadd.f32 %v308, 1e-06
      %v311 = vadd.f32 %v309, 1e-06
      %v312 = vrsqrt.pop %v310
      %v313 = vrsqrt.pop %v311
      %v314 = vmul.f32 %v300, %v312
      %v315 = vmul.f32 %v301, %v313
      %v316 = vld [vmem:[%s5] sm:$0x1]
      %v318 = vlaneseq
      %v319 = vshrl.u32 %v318, 7
      %v320 = vsub.s32 0, %v319
      %v321 = vrot.slane %v316, %v320
      %v323 = vmul.f32 %v314, %v321
      %v324 = vmul.f32 %v315, %v321
      %v325 = vld [vmem:[%s6] sm:$0x1]
      %v327 = vlaneseq
      %v328 = vshrl.u32 %v327, 7
      %v329 = vsub.s32 0, %v328
      %v330 = vrot.slane %v325, %v329
      %v332 = vadd.f32 %v323, %v330
      %v333 = vadd.f32 %v324, %v330
      %334 = vst [vmem:[#allocation9] sm:$0xff] %v332
      %335 = vst [vmem:[#allocation9 + $0x8] sm:$0xff] %v333
    $region49: #{tpu_custom_call.1} parent=1 // pred_fallthru
      _
    // Predicated region
    $region50: #{tpu_custom_call.1} parent=1 // pred_check
      _
    $region51: #{tpu_custom_call.1} parent=1 // pred_check_branch
      %337 = sbr.rel (0) target = $region53
    $region52: #{tpu_custom_call.1} parent=1 // pred_region
      %s339 = ssub.s32 256, 256
      %340 = vsyncadd [#allocation5], %s339
      %s341 = sshll.u32 [#allocation9], 4
      %s342 = int_to_ptr.vmem [resolvable:$true] %s341
      %347 = dma.vmem_to_hbm [thread:$0]  %s342, 256, %s7, [#allocation5], 128, 128, 8
    $region53: #{tpu_custom_call.1} parent=1 // pred_fallthru
      _
    // Predicated region
    $region54: #{tpu_custom_call.1} parent=1 // pred_check
      _
    $region55: #{tpu_custom_call.1} parent=1 // pred_check_branch
      %349 = sbr.rel (0) target = $region57
    $region56: #{tpu_custom_call.1} parent=1 // pred_region
      %350 = dma.done [#allocation5], 256
    $region57: #{tpu_custom_call.1} parent=1 // pred_fallthru
      _
    %351 = vsyncpa [#allocation4], 1
    %352 = vsyncpa [#allocation7], 1
    %353 = vsyncpa [#allocation5], 1

</llo_original>
